<compile_context>
chip_gen: v7x
topology: tpu7x:2x2x1
jax: 0.10.0
libtpu: 0.0.40
codegen_flags: <defaults>
</compile_context>

<pallas_src>
import functools
import math

import jax
import jax.numpy as jnp
from jax import lax
from jax.experimental import pallas as pl
from jax.experimental.pallas import tpu as pltpu


# ----------------------------------------------------------------------------
# tiling helpers
# ----------------------------------------------------------------------------
def _pick_tile(dim, unit, cap):
    """Largest multiple-of-`unit` divisor of `dim` that is <= cap; else `dim`.

    Satisfies the TPU block constraint: last-two block dims must be a multiple
    of (8, 128) or equal to the full array dim.
    """
    if dim % unit != 0:
        return dim
    cand = (min(cap, dim) // unit) * unit
    while cand >= unit:
        if dim % cand == 0:
            return cand
        cand -= unit
    return dim


def _plan_feature_layout(feat):
    """Reshape plan for one flattened image of `feat` elements -> (R, L)."""
    lane = _pick_tile(feat, 128, 1024)      # lane-dense last dim
    rows = feat // lane
    row_tile = _pick_tile(rows, 8, 256)     # ~<=1 MiB f32 tiles -> 6 MiB VMEM
    return lane, rows, row_tile             # with double-buffering (fits every gen)


# ----------------------------------------------------------------------------
# Kernel 1: label-smoothed one-hot ("scatter_" in the PyTorch code)
# ----------------------------------------------------------------------------
def _smooth_one_hot_kernel(tgt_ref, out_ref, *, on_val, off_val):
    # tgt_ref: (TB, 1) int32, out_ref: (TB, TC)
    tb, tc = out_ref.shape
    j = pl.program_id(1)
    col = j * tc + lax.broadcasted_iota(jnp.int32, (tb, tc), 1)
    hit = col == tgt_ref[...]                               # (TB,1) broadcasts over TC
    out_ref[...] = jnp.where(hit, jnp.float32(on_val),
                             jnp.float32(off_val)).astype(out_ref.dtype)


def smooth_one_hot(targets, num_classes, label_smoothing, out_dtype=jnp.float32):
    """targets: (B,) int -> (B, num_classes) label-smoothed one-hot."""
    assert num_classes >= 2, "num_classes must be >= 2 (off value divides by C-1)"
    # TODO(synk): out-of-range / ignore-index targets (e.g. -100) silently yield an
    # all-off_val row here, whereas torch.scatter_ would raise.
    B = int(targets.shape[0])
    C = int(num_classes)
    tgt2d = targets.astype(jnp.int32).reshape(B, 1)

    tb = _pick_tile(B, 8, 512)
    tc = _pick_tile(C, 128, 1024)
    grid = (B // tb, C // tc)

    kernel = functools.partial(
        _smooth_one_hot_kernel,
        on_val=float(1.0 - label_smoothing),
        off_val=float(label_smoothing / (num_classes - 1)),
    )
    return pl.pallas_call(
        kernel,
        out_shape=jax.ShapeDtypeStruct((B, C), out_dtype),
        grid=grid,
        in_specs=[pl.BlockSpec((tb, 1), lambda i, j: (i, 0))],
        out_specs=pl.BlockSpec((tb, tc), lambda i, j: (i, j)),
        compiler_params=pltpu.CompilerParams(
            dimension_semantics=("parallel", "parallel")),
    )(tgt2d)


# ----------------------------------------------------------------------------
# Kernel 2: mixup input mixing  mixed = lam * x + (1 - lam) * x[rand_index]
# ----------------------------------------------------------------------------
def _mixup_mix_kernel(idx_ref, lam_ref, x_ref, xp_ref, out_ref):
    # idx_ref: (N,) int32 in SMEM (scalar prefetch, consumed by index_maps)
    # lam_ref: (1, 1) f32 in SMEM
    del idx_ref
    lam = lam_ref[0, 0]
    one_minus_lam = 1.0 - lam                       # hoisted: computed once per block
    out_ref[...] = (lam * x_ref[...] + one_minus_lam * xp_ref[...]).astype(out_ref.dtype)


def mixup_mix(x, rand_index, lam):
    """x: (N, ...) array, rand_index: (N,) int permutation, lam: scalar.

    Returns lam * x + (1 - lam) * x[rand_index] with x's dtype preserved.
    The permuted operand is gathered in the index_map (no HBM pre-gather).
    """
    N = int(x.shape[0])
    feat = math.prod(int(d) for d in x.shape[1:])
    lane, rows, row_tile = _plan_feature_layout(feat)

    x3d = x.reshape(N, rows, lane)
    lam_arr = jnp.full((1, 1), lam, dtype=jnp.float32)
    rand_index = rand_index.astype(jnp.int32)

    grid = (N, rows // row_tile)
    blk = (1, row_tile, lane)

    out3d = pl.pallas_call(
        _mixup_mix_kernel,
        out_shape=jax.ShapeDtypeStruct((N, rows, lane), x.dtype),
        grid_spec=pltpu.PrefetchScalarGridSpec(
            num_scalar_prefetch=1,                       # rand_index -> SMEM
            grid=grid,
            in_specs=[
                pl.BlockSpec(memory_space=pltpu.SMEM),   # lam scalar
                pl.BlockSpec(blk, lambda n, j, idx: (n, j, 0)),       # x[n]
                pl.BlockSpec(blk, lambda n, j, idx: (idx[n], j, 0)),  # x[perm[n]]
            ],
            out_specs=pl.BlockSpec(blk, lambda n, j, idx: (n, j, 0)),
        ),
        compiler_params=pltpu.CompilerParams(
            dimension_semantics=("parallel", "parallel")),
    )(rand_index, lam_arr, x3d, x3d)
    # NOTE: no input_output_aliases here — the in-kernel permuted gather reads x
    # blocks that an aliased write could have already overwritten.
    return out3d.reshape(x.shape)


# ----------------------------------------------------------------------------
# Thin Python analogue of the `_Loss` module (no parameters in __init__).
# ----------------------------------------------------------------------------
class PallasLoss:
    def __init__(self, num_classes, label_smoothing=0.1, beta=1, cutmix_prob=0.5):
        assert 0 <= label_smoothing < 1
        self.num_classes = num_classes
        self.label_smoothing = label_smoothing
        self.beta = beta
        self.cutmix_prob = cutmix_prob

    def smooth_one_hot(self, targets, out_dtype=jnp.float32):
        return smooth_one_hot(targets, self.num_classes, self.label_smoothing,
                              out_dtype=out_dtype)

    def mixup_inputs(self, x, rand_index, lam):
        return mixup_mix(x, rand_index, lam)

    # TODO(synk): loss_fn / forward are abstract (NotImplementedError) in the
    # reference module; mixup/cutmix additionally require an external `model(...)`
    # call and host-side Beta/randperm sampling, so they are not kernelized.


if __name__ == "__main__":
    key = jax.random.PRNGKey(0)
    k1, k2, k3, k4, k5 = jax.random.split(key, 5)

    B, NUM_CLASSES = 8, 10
    N, C, H, W = 2, 4, 16, 16

    loss_mod = PallasLoss(num_classes=NUM_CLASSES, label_smoothing=0.1,
                          beta=1, cutmix_prob=0.5)

    # --- smooth_one_hot path ---
    targets = jax.random.randint(k1, (B,), 0, NUM_CLASSES, dtype=jnp.int32)
    oh = loss_mod.smooth_one_hot(targets)
    jax.block_until_ready(oh)

    ref = jnp.full((B, NUM_CLASSES), 0.1 / (NUM_CLASSES - 1), jnp.float32)
    ref = ref.at[jnp.arange(B), targets].set(1.0 - 0.1)
    assert jnp.allclose(oh, ref, atol=1e-6), "smooth_one_hot mismatch"

    # --- mixup input-mixing path (deterministic lam / permutation) ---
    x = jax.random.normal(k2, (N, C, H, W), dtype=jnp.float32)
    rand_index = jax.random.permutation(k3, N).astype(jnp.int32)
    lam = 0.7
    mixed = loss_mod.mixup_inputs(x, rand_index, lam)
    jax.block_until_ready(mixed)

    ref_mixed = lam * x + (1.0 - lam) * x[rand_index]
    assert jnp.allclose(mixed, ref_mixed, atol=1e-6), "mixup mix mismatch"

    # --- second mixup check: larger batch exercises the permuted-block gather ---
    N2 = 4
    x2 = jax.random.normal(k4, (N2, C, H, W), dtype=jnp.float32)
    rand_index2 = jax.random.permutation(k5, N2).astype(jnp.int32)
    lam2 = 0.35
    mixed2 = loss_mod.mixup_inputs(x2, rand_index2, lam2)
    jax.block_until_ready(mixed2)
    ref_mixed2 = lam2 * x2 + (1.0 - lam2) * x2[rand_index2]
    assert jnp.allclose(mixed2, ref_mixed2, atol=1e-6), "mixup mix mismatch (N=4)"

    print("KERNEL_OK")
</pallas_src>

<mosaic_0001>
module attributes {stable_mosaic.version = 11 : i64} {
  func.func @_smooth_one_hot_kernel(%arg0: i32, %arg1: i32, %arg2: memref<8x1xi32, #tpu.memory_space<vmem>>, %arg3: memref<8x10xf32, #tpu.memory_space<vmem>>) attributes {dimension_semantics = [#tpu.dimension_semantics<parallel>, #tpu.dimension_semantics<parallel>], iteration_bounds = array<i64: 1, 1>, scalar_prefetch = 0 : i64, scratch_operands = 0 : i64, tpu.core_type = #tpu.core_type<tc>, window_params = [{transform_indices = @transform_0, window_bounds = array<i64: 8, 1>}, {transform_indices = @transform_1, window_bounds = array<i64: 8, 10>}]} {
    %c10_i32 = arith.constant 10 : i32
    %0 = arith.muli %arg1, %c10_i32 : i32
    %1 = tpu.iota {dimensions = array<i32: 1>} : vector<8x10xi32>
    %2 = vector.broadcast %0 : i32 to vector<8x10xi32>
    %3 = arith.addi %2, %1 : vector<8x10xi32>
    %c0 = arith.constant 0 : index
    %c0_0 = arith.constant 0 : index
    %4 = vector.load %arg2[%c0, %c0_0] : memref<8x1xi32, #tpu.memory_space<vmem>>, vector<8x1xi32>
    %5 = vector.broadcast %4 : vector<8x1xi32> to vector<8x10xi32>
    %6 = arith.cmpi eq, %3, %5 : vector<8x10xi32>
    %cst = arith.constant 0.899999976 : f32
    %cst_1 = arith.constant 0.0111111114 : f32
    %7 = vector.broadcast %cst : f32 to vector<8x10xf32>
    %8 = vector.broadcast %cst_1 : f32 to vector<8x10xf32>
    %9 = arith.select %6, %7, %8 : vector<8x10xi1>, vector<8x10xf32>
    %c0_2 = arith.constant 0 : index
    %c0_3 = arith.constant 0 : index
    %10 = vector.load %arg3[%c0_2, %c0_3] : memref<8x10xf32, #tpu.memory_space<vmem>>, vector<8x10xf32>
    tpu.vector_store %arg3[%c0_2, %c0_3], %9 {strides = array<i32>} : memref<8x10xf32, #tpu.memory_space<vmem>>, vector<8x10xf32>,
    return
  }
  func.func @transform_0(%arg0: i32, %arg1: i32) -> (i32, i32) {
    %c0_i32 = arith.constant 0 : i32
    %c0_i32_0 = arith.constant 0 : i32
    return %arg0, %c0_i32 : i32, i32
  }
  func.func @transform_1(%arg0: i32, %arg1: i32) -> (i32, i32) {
    %c0_i32 = arith.constant 0 : i32
    return %arg0, %arg1 : i32, i32
  }
}

</mosaic_0001>

<llo_original>
// kernel: tpu_custom_call.1
$region0: #{tpu_custom_call.1}
  #allocation0 [shape = 'u32[]', space=smem, size = 0x4, offset = 0x4, fixed_abs, tag = 'smem constant byte address 0x4 - core index']
  #allocation1 [shape = 'u32[144,128]{1,0:T(1,128)}', space=vmem, size = 0x12000, scoped, tag = 'internal scratch']
  %s0 = inlined_call_operand.vmem [shape: s32[8,1], index: 0, kind: input, shape index: {}]
  %s1 = inlined_call_operand.hbm [shape: f32[8,10], index: 1, kind: output, shape index: {}]
  %s2 = sld [smem:[#allocation0]]
  $region14: #{tpu_custom_call.1} parent=0
    _
  %s4 = ssub.s32 1, %s2
  %s5 = scalar_select 0, %s4, %s2
  $region1: #{tpu_custom_call.1} parent=0
    #allocation2 [shape = 'u8[4096]{0}', space=vmem, size = 0x1000, scoped, tag = 'output window, operand 0, single buffered']
    #allocation3 [shape = 's32[1]{0}', space=sflag, size = 0x4, scoped, tag = 'scoped memory for tpu_custom_call.1']
    %6 = vsyncpa [#allocation3], 0
    // Predicated region
    $region2: #{tpu_custom_call.1} parent=1 // pred_check
      _
    $region3: #{tpu_custom_call.1} parent=1 // pred_check_branch
      %8 = sbr.rel (0) target = $region5
    $region4: #{tpu_custom_call.1} parent=1 // pred_region
      _
    $region5: #{tpu_custom_call.1} parent=1 // pred_fallthru
      _
    %s9 = smul.u32 0, 10
    %v10 = vlaneseq
    %v11 = vand.u32 %v10, 127
    %v12 = vstv %s9
    %v13 = vadd.s32 %v12, %v11
    %v14 = vld [vmem:[%s0] sm:$0xff]
    %15 = vset.pattern.permute.xlu0 0
    %16 = vperm.xlu0 %15, %v14
    %v17 = vpop.permute.xlu0 %16
    %vm18 = vcmp.eq.s32.totalorder %v13, %v17
    %v19 = vsel %vm18, 0.9, 0.011111111
    %vm20 = vcmask 80896
    %21 = vst.msk [vmem:[#allocation2] sm:$0xff] %vm20, %v19
    // Predicated region
    $region6: #{tpu_custom_call.1} parent=1 // pred_check
      _
    $region7: #{tpu_custom_call.1} parent=1 // pred_check_branch
      %23 = sbr.rel (0) target = $region9
    $region8: #{tpu_custom_call.1} parent=1 // pred_region
      %s25 = ssub.s32 128, 128
      %26 = vsyncadd [#allocation3], %s25
      %s28 = sshll.u32 [#allocation2], 4
      %s29 = int_to_ptr.vmem [resolvable:$true] %s28
      %31 = dma.vmem_to_hbm [thread:$0]  %s29, 128, %s1, [#allocation3]
    $region9: #{tpu_custom_call.1} parent=1 // pred_fallthru
      _
    // Predicated region
    $region10: #{tpu_custom_call.1} parent=1 // pred_check
      _
    $region11: #{tpu_custom_call.1} parent=1 // pred_check_branch
      %33 = sbr.rel (0) target = $region13
    $region12: #{tpu_custom_call.1} parent=1 // pred_region
      %34 = dma.done [#allocation3], 128
    $region13: #{tpu_custom_call.1} parent=1 // pred_fallthru
      _
    %35 = vsyncpa [#allocation3], 1

</llo_original>
